<compile_context>
chip_gen: v5e
topology: v5e:2x2
jax: 0.10.0
libtpu: 0.0.40
codegen_flags: <defaults>
</compile_context>

<pallas_src>
import jax
import jax.numpy as jnp
from jax.experimental import pallas as pl
from jax.experimental.pallas import tpu as pltpu

LANES = 128  # TPU lane width: batch elements packed per output row.


def linear_kernel(x_ref, m_ref, b_ref, o_ref):
    """One batch tile of  y = x @ W.T + b  in the packed layout.

    x_ref: VMEM [rows, 128*F]  row r = 128 batch elements, F features interleaved
    m_ref: VMEM [128*F, 128]   kron(I_128, W.T): de-interleave + weighting, resident
    b_ref: SMEM [1]            bias
    o_ref: VMEM [rows, 128]    lane-dense: o[r, j] = y[128*r + j]
    """
    y = jnp.dot(x_ref[...], m_ref[...],
                preferred_element_type=jnp.float32,
                precision=jax.lax.Precision.HIGHEST)
    o_ref[...] = (y + b_ref[0]).astype(o_ref.dtype)


def simple_stock_model(x, weight, bias, *, block_rows=1024):
    """Forward pass of SimpleStockModel: y = x @ W.T + b.

    Args:
      x:      [B, F] float32
      weight: [1, F] float32  (PyTorch nn.Linear layout)
      bias:   [1]    float32
      block_rows: packed rows (of 128 batch elements each) per grid step, multiple of 8.
    Returns:
      [B, 1] float32
    """
    B, F = x.shape
    O, Fw = weight.shape
    assert O == 1 and Fw == F, "SimpleStockModel is a single-output linear layer"

    # Pad the batch to a multiple of 128 only if needed (the packed reshape must be exact).
    Bp = pl.cdiv(B, LANES) * LANES
    if Bp != B:
        x = jnp.pad(x, ((0, Bp - B), (0, 0)))
    R = Bp // LANES          # packed rows
    C = LANES * F            # packed row width (lanes)

    # Free, contiguous (bitcast) reshape: no transpose / relayout pass over HBM.
    xp = x.reshape(R, C)

    # Fold the linear map and the feature de-interleave into one small resident matrix:
    #   M[k*F + f, j] = weight[0, f] if k == j else 0.
    m = jnp.kron(jnp.eye(LANES, dtype=jnp.float32),
                 weight.astype(jnp.float32).T)           # [128*F, 128]
    b_flat = bias.reshape(O).astype(jnp.float32)         # [1] -> SMEM scalar

    # Tile the packed-row axis; single grid step whenever everything fits in one tile.
    block_rows = max(8, (block_rows // 8) * 8)
    if R <= block_rows:
        rows, num_tiles = R, 1
    else:
        rows, num_tiles = block_rows, pl.cdiv(R, block_rows)

    out2d = pl.pallas_call(
        linear_kernel,
        out_shape=jax.ShapeDtypeStruct((R, LANES), x.dtype),
        grid_spec=pltpu.PrefetchScalarGridSpec(
            num_scalar_prefetch=0,
            grid=(num_tiles,),
            in_specs=[
                # Input tile: fully (8,128)-dense f32 blocks of the packed view.
                pl.BlockSpec((rows, C), lambda i: (i, 0)),
                # M stays resident (constant block index -> fetched once).
                pl.BlockSpec((C, LANES), lambda i: (0, 0)),
                # Bias scalar lives in SMEM (no padded VMEM tile, no per-step DMA).
                pl.BlockSpec(memory_space=pltpu.MemorySpace.SMEM),
            ],
            # Lane- and sublane-dense output blocks: unmasked vector stores and
            # contiguous HBM writeback.
            out_specs=pl.BlockSpec((rows, LANES), lambda i: (i, 0)),
        ),
        compiler_params=pltpu.CompilerParams(
            # Megacore-shard the batch tiles only when there are several of them (v7x);
            # with a single tile it is pointless.
            dimension_semantics=("parallel",) if num_tiles > 1 else ("arbitrary",),
        ),
    )(xp, m, b_flat)

    # Free reshapes; the [:B] slice is a no-op when B is already a multiple of 128.
    return out2d.reshape(Bp)[:B].reshape(B, O)


if __name__ == "__main__":
    key = jax.random.PRNGKey(0)
    k_x, k_w, k_b = jax.random.split(key, 3)

    batch = 1024             # multiple of 128 -> pad-free, single grid step
    input_size = 2
    out_features = 1

    # Deterministic synthetic parameters (mimicking nn.Linear's uniform init range).
    bound = 1.0 / (input_size ** 0.5)
    weight = jax.random.uniform(k_w, (out_features, input_size),
                                minval=-bound, maxval=bound, dtype=jnp.float32)
    bias = jax.random.uniform(k_b, (out_features,),
                              minval=-bound, maxval=bound, dtype=jnp.float32)
    x = jax.random.normal(k_x, (batch, input_size), dtype=jnp.float32)

    fwd = jax.jit(simple_stock_model)

    out = jax.block_until_ready(fwd(x, weight, bias))
    ref = x @ weight.T + bias
    assert out.shape == (batch, out_features)
    assert jnp.allclose(out, ref, atol=1e-4, rtol=1e-4), \
        float(jnp.max(jnp.abs(out - ref)))

    # Also exercise the padded (B % 128 != 0) path once.
    x_small = jax.random.normal(k_x, (100, input_size), dtype=jnp.float32)
    out_small = jax.block_until_ready(fwd(x_small, weight, bias))
    ref_small = x_small @ weight.T + bias
    assert out_small.shape == (100, out_features)
    assert jnp.allclose(out_small, ref_small, atol=1e-4, rtol=1e-4)

    print("KERNEL_OK")
</pallas_src>

<mosaic_0001>
module attributes {stable_mosaic.version = 11 : i64} {
  func.func @linear_kernel(%arg0: i32, %arg1: memref<8x256xf32, #tpu.memory_space<vmem>>, %arg2: memref<256x128xf32, #tpu.memory_space<vmem>>, %arg3: memref<1xf32, #tpu.memory_space<smem>>, %arg4: memref<8x128xf32, #tpu.memory_space<vmem>>) attributes {dimension_semantics = [#tpu.dimension_semantics<arbitrary>], iteration_bounds = array<i64: 1>, scalar_prefetch = 0 : i64, scratch_operands = 0 : i64, tpu.core_type = #tpu.core_type<tc>, window_params = [{transform_indices = @transform_0, window_bounds = array<i64: 8, 256>}, {pipeline_mode = #tpu.pipeline_mode<synchronous>, transform_indices = @transform_1, window_bounds = array<i64: 256, 128>}, {transform_indices = @transform_2, window_bounds = array<i64: 1>}, {transform_indices = @transform_3, window_bounds = array<i64: 8, 128>}]} {
    %c0 = arith.constant 0 : index
    %c0_0 = arith.constant 0 : index
    %0 = vector.load %arg1[%c0, %c0_0] : memref<8x256xf32, #tpu.memory_space<vmem>>, vector<8x256xf32>
    %c0_1 = arith.constant 0 : index
    %c0_2 = arith.constant 0 : index
    %1 = vector.load %arg2[%c0_1, %c0_2] : memref<256x128xf32, #tpu.memory_space<vmem>>, vector<256x128xf32>
    %cst = arith.constant dense<0.000000e+00> : vector<8x128xf32>
    %2 = tpu.matmul %0, %1, %cst {dimension_numbers = #tpu.dot_dimension_numbers<[1], [0], [0], [1], [0, 0, 1, 1], [], []>, precision = #tpu.contract_precision<fp32>} : vector<8x256xf32>, vector<256x128xf32>, vector<8x128xf32> -> vector<8x128xf32>
    %c0_3 = arith.constant 0 : index
    %3 = memref.load %arg3[%c0_3] : memref<1xf32, #tpu.memory_space<smem>>
    %4 = vector.broadcast %3 : f32 to vector<8x128xf32>
    %5 = arith.addf %2, %4 : vector<8x128xf32>
    %c0_4 = arith.constant 0 : index
    %c0_5 = arith.constant 0 : index
    %6 = vector.load %arg4[%c0_4, %c0_5] : memref<8x128xf32, #tpu.memory_space<vmem>>, vector<8x128xf32>
    tpu.vector_store %arg4[%c0_4, %c0_5], %5 {strides = array<i32>} : memref<8x128xf32, #tpu.memory_space<vmem>>, vector<8x128xf32>,
    return
  }
  func.func @transform_0(%arg0: i32) -> (i32, i32) {
    %c0_i32 = arith.constant 0 : i32
    %c0_i32_0 = arith.constant 0 : i32
    return %arg0, %c0_i32 : i32, i32
  }
  func.func @transform_1(%arg0: i32) -> (i32, i32) {
    %c0_i32 = arith.constant 0 : i32
    %c0_i32_0 = arith.constant 0 : i32
    %c0_i32_1 = arith.constant 0 : i32
    return %c0_i32, %c0_i32_0 : i32, i32
  }
  func.func @transform_2(%arg0: i32) -> i32 {
    %c0_i32 = arith.constant 0 : i32
    %c0_i32_0 = arith.constant 0 : i32
    return %c0_i32 : i32
  }
  func.func @transform_3(%arg0: i32) -> (i32, i32) {
    %c0_i32 = arith.constant 0 : i32
    %c0_i32_0 = arith.constant 0 : i32
    return %arg0, %c0_i32 : i32, i32
  }
}

</mosaic_0001>

<llo_original>
// kernel: simple_stock_model.1
$region0: #{simple_stock_model.1}
  #allocation0 [shape = 'u32[]', space=smem, size = 0x4, offset = 0x4, fixed_abs, tag = 'smem constant byte address 0x4 - core index']
  #allocation1 [shape = 'u32[72,128]{1,0:T(1,128)}', space=vmem, size = 0x9000, scoped, tag = 'internal scratch']
  #allocation2 [shape = 'f32[1]{0:T(128)S(6)}', space=smem, size = 0x200, scoped, tag = 'scoped memory for simple_stock_model.1']
  %s0 = inlined_call_operand.vmem [shape: f32[8,256], index: 0, kind: input, shape index: {}]
  %s1 = inlined_call_operand.vmem [shape: f32[256,128], index: 1, kind: input, shape index: {}]
  %s2 = inlined_call_operand.<no memory space> [shape: f32[1], index: 2, kind: input, shape index: {}]
  %s3 = inlined_call_operand.hbm [shape: f32[8,128], index: 3, kind: output, shape index: {}]
  %s4 = sld [smem:[#allocation0]]
  $region22: #{simple_stock_model.1} parent=0
    _
  %s6 = ssub.s32 1, %s4
  %s7 = scalar_select 0, %s6, %s4
  %8 = sst [smem:[#allocation2]] %s2
  $region1: #{simple_stock_model.1} parent=0
    #allocation3 [shape = 'u8[4096]{0}', space=vmem, size = 0x1000, scoped, tag = 'output window, operand 0, single buffered']
    #allocation4 [shape = 's32[1]{0}', space=sflag, size = 0x4, scoped, tag = 'scoped memory for simple_stock_model.1']
    %9 = vsyncpa [#allocation4], 0
    // Predicated region
    $region2: #{simple_stock_model.1} parent=1 // pred_check
      _
    $region3: #{simple_stock_model.1} parent=1 // pred_check_branch
      %11 = sbr.rel (0) target = $region5
    $region4: #{simple_stock_model.1} parent=1 // pred_region
      _
    $region5: #{simple_stock_model.1} parent=1 // pred_fallthru
      _
    // Predicated region
    $region6: #{simple_stock_model.1} parent=1 // pred_check
      _
    $region7: #{simple_stock_model.1} parent=1 // pred_check_branch
      %13 = sbr.rel (0) target = $region9
    $region8: #{simple_stock_model.1} parent=1 // pred_region
      _
    $region9: #{simple_stock_model.1} parent=1 // pred_fallthru
      _
    // Predicated region
    $region10: #{simple_stock_model.1} parent=1 // pred_check
      _
    $region11: #{simple_stock_model.1} parent=1 // pred_check_branch
      %15 = sbr.rel (0) target = $region13
    $region12: #{simple_stock_model.1} parent=1 // pred_region
      _
    $region13: #{simple_stock_model.1} parent=1 // pred_fallthru
      _
    %v16 = vld [vmem:[%s0] sm:$0xff]
    %v17 = vld [vmem:[%s0 + $0x8] sm:$0xff]
    %v18 = vld [vmem:[%s1] sm:$0xff]
    %v19 = vld [vmem:[%s1 + $0x8] sm:$0xff]
    %v20 = vld [vmem:[%s1 + $0x10] sm:$0xff]
    %v21 = vld [vmem:[%s1 + $0x18] sm:$0xff]
    %v22 = vld [vmem:[%s1 + $0x20] sm:$0xff]
    %v23 = vld [vmem:[%s1 + $0x28] sm:$0xff]
    %v24 = vld [vmem:[%s1 + $0x30] sm:$0xff]
    %v25 = vld [vmem:[%s1 + $0x38] sm:$0xff]
    %v26 = vld [vmem:[%s1 + $0x40] sm:$0xff]
    %v27 = vld [vmem:[%s1 + $0x48] sm:$0xff]
    %v28 = vld [vmem:[%s1 + $0x50] sm:$0xff]
    %v29 = vld [vmem:[%s1 + $0x58] sm:$0xff]
    %v30 = vld [vmem:[%s1 + $0x60] sm:$0xff]
    %v31 = vld [vmem:[%s1 + $0x68] sm:$0xff]
    %v32 = vld [vmem:[%s1 + $0x70] sm:$0xff]
    %v33 = vld [vmem:[%s1 + $0x78] sm:$0xff]
    %v34 = vld [vmem:[%s1 + $0x80] sm:$0xff]
    %v35 = vld [vmem:[%s1 + $0x88] sm:$0xff]
    %v36 = vld [vmem:[%s1 + $0x90] sm:$0xff]
    %v37 = vld [vmem:[%s1 + $0x98] sm:$0xff]
    %v38 = vld [vmem:[%s1 + $0xa0] sm:$0xff]
    %v39 = vld [vmem:[%s1 + $0xa8] sm:$0xff]
    %v40 = vld [vmem:[%s1 + $0xb0] sm:$0xff]
    %v41 = vld [vmem:[%s1 + $0xb8] sm:$0xff]
    %v42 = vld [vmem:[%s1 + $0xc0] sm:$0xff]
    %v43 = vld [vmem:[%s1 + $0xc8] sm:$0xff]
    %v44 = vld [vmem:[%s1 + $0xd0] sm:$0xff]
    %v45 = vld [vmem:[%s1 + $0xd8] sm:$0xff]
    %v46 = vld [vmem:[%s1 + $0xe0] sm:$0xff]
    %v47 = vld [vmem:[%s1 + $0xe8] sm:$0xff]
    %v48 = vld [vmem:[%s1 + $0xf0] sm:$0xff]
    %v49 = vld [vmem:[%s1 + $0xf8] sm:$0xff]
    %s50 = sld [smem:[#allocation2]]
    %v51 = vstv %s50
    %v52 = vand.u32 %v33, 4294901760
    %53 = vmatpush.msra.mxu0 %v52
    %v54 = vand.u32 %v32, 4294901760
    %55 = vmatpush.msra.mxu0 %v54
    %v56 = vand.u32 %v31, 4294901760
    %57 = vmatpush.msra.mxu0 %v56
    %v58 = vand.u32 %v30, 4294901760
    %59 = vmatpush.msra.mxu0 %v58
    %v60 = vand.u32 %v29, 4294901760
    %61 = vmatpush.msra.mxu0 %v60
    %v62 = vand.u32 %v28, 4294901760
    %63 = vmatpush.msra.mxu0 %v62
    %v64 = vand.u32 %v27, 4294901760
    %65 = vmatpush.msra.mxu0 %v64
    %v66 = vand.u32 %v26, 4294901760
    %67 = vmatpush.msra.mxu0 %v66
    %v68 = vand.u32 %v25, 4294901760
    %69 = vmatpush.msra.mxu0 %v68
    %v70 = vand.u32 %v24, 4294901760
    %71 = vmatpush.msra.mxu0 %v70
    %v72 = vand.u32 %v23, 4294901760
    %73 = vmatpush.msra.mxu0 %v72
    %v74 = vand.u32 %v22, 4294901760
    %75 = vmatpush.msra.mxu0 %v74
    %v76 = vand.u32 %v21, 4294901760
    %77 = vmatpush.msra.mxu0 %v76
    %v78 = vand.u32 %v20, 4294901760
    %79 = vmatpush.msra.mxu0 %v78
    %v80 = vand.u32 %v19, 4294901760
    %81 = vmatpush.msra.mxu0 %v80
    %v82 = vand.u32 %v18, 4294901760
    %83 = vmatpush.msra.mxu0 %v82
    %v84 = vand.u32 %v16, 4294901760
    %v85 = vsub.f32 %v16, %v84
    %v86 = vand.u32 %v85, 4294901760
    %v87 = vsub.f32 %v85, %v86
    %v88 = vand.u32 %v87, 4294901760
    %89 = vmatmul.f32.gmra.mxu0 %v88
    %v90 = vpop.f32.mrf.mxu0
    %v91 = vadd.f32 %v51, %v90
    %92 = vdwg.mxu0
    %v93 = vand.u32 %v33, 4294901760
    %v94 = vsub.f32 %v33, %v93
    %v95 = vand.u32 %v94, 4294901760
    %v96 = vsub.f32 %v94, %v95
    %v97 = vand.u32 %v96, 4294901760
    %98 = vmatpush.msra.mxu0 %v97
    %v99 = vand.u32 %v32, 4294901760
    %v100 = vsub.f32 %v32, %v99
    %v101 = vand.u32 %v100, 4294901760
    %v102 = vsub.f32 %v100, %v101
    %v103 = vand.u32 %v102, 4294901760
    %104 = vmatpush.msra.mxu0 %v103
    %v105 = vand.u32 %v31, 4294901760
    %v106 = vsub.f32 %v31, %v105
    %v107 = vand.u32 %v106, 4294901760
    %v108 = vsub.f32 %v106, %v107
    %v109 = vand.u32 %v108, 4294901760
    %110 = vmatpush.msra.mxu0 %v109
    %v111 = vand.u32 %v30, 4294901760
    %v112 = vsub.f32 %v30, %v111
    %v113 = vand.u32 %v112, 4294901760
    %v114 = vsub.f32 %v112, %v113
    %v115 = vand.u32 %v114, 4294901760
    %116 = vmatpush.msra.mxu0 %v115
    %v117 = vand.u32 %v29, 4294901760
    %v118 = vsub.f32 %v29, %v117
    %v119 = vand.u32 %v118, 4294901760
    %v120 = vsub.f32 %v118, %v119
    %v121 = vand.u32 %v120, 4294901760
    %122 = vmatpush.msra.mxu0 %v121
    %v123 = vand.u32 %v28, 4294901760
    %v124 = vsub.f32 %v28, %v123
    %v125 = vand.u32 %v124, 4294901760
    %v126 = vsub.f32 %v124, %v125
    %v127 = vand.u32 %v126, 4294901760
    %128 = vmatpush.msra.mxu0 %v127
    %v129 = vand.u32 %v27, 4294901760
    %v130 = vsub.f32 %v27, %v129
    %v131 = vand.u32 %v130, 4294901760
    %v132 = vsub.f32 %v130, %v131
    %v133 = vand.u32 %v132, 4294901760
    %134 = vmatpush.msra.mxu0 %v133
    %v135 = vand.u32 %v26, 4294901760
    %v136 = vsub.f32 %v26, %v135
    %v137 = vand.u32 %v136, 4294901760
    %v138 = vsub.f32 %v136, %v137
    %v139 = vand.u32 %v138, 4294901760
    %140 = vmatpush.msra.mxu0 %v139
    %v141 = vand.u32 %v25, 4294901760
    %v142 = vsub.f32 %v25, %v141
    %v143 = vand.u32 %v142, 4294901760
    %v144 = vsub.f32 %v142, %v143
    %v145 = vand.u32 %v144, 4294901760
    %146 = vmatpush.msra.mxu0 %v145
    %v147 = vand.u32 %v24, 4294901760
    %v148 = vsub.f32 %v24, %v147
    %v149 = vand.u32 %v148, 4294901760
    %v150 = vsub.f32 %v148, %v149
    %v151 = vand.u32 %v150, 4294901760
    %152 = vmatpush.msra.mxu0 %v151
    %v153 = vand.u32 %v23, 4294901760
    %v154 = vsub.f32 %v23, %v153
    %v155 = vand.u32 %v154, 4294901760
    %v156 = vsub.f32 %v154, %v155
    %v157 = vand.u32 %v156, 4294901760
    %158 = vmatpush.msra.mxu0 %v157
    %v159 = vand.u32 %v22, 4294901760
    %v160 = vsub.f32 %v22, %v159
    %v161 = vand.u32 %v160, 4294901760
    %v162 = vsub.f32 %v160, %v161
    %v163 = vand.u32 %v162, 4294901760
    %164 = vmatpush.msra.mxu0 %v163
    %v165 = vand.u32 %v21, 4294901760
    %v166 = vsub.f32 %v21, %v165
    %v167 = vand.u32 %v166, 4294901760
    %v168 = vsub.f32 %v166, %v167
    %v169 = vand.u32 %v168, 4294901760
    %170 = vmatpush.msra.mxu0 %v169
    %v171 = vand.u32 %v20, 4294901760
    %v172 = vsub.f32 %v20, %v171
    %v173 = vand.u32 %v172, 4294901760
    %v174 = vsub.f32 %v172, %v173
    %v175 = vand.u32 %v174, 4294901760
    %176 = vmatpush.msra.mxu0 %v175
    %v177 = vand.u32 %v19, 4294901760
    %v178 = vsub.f32 %v19, %v177
    %v179 = vand.u32 %v178, 4294901760
    %v180 = vsub.f32 %v178, %v179
    %v181 = vand.u32 %v180, 4294901760
    %182 = vmatpush.msra.mxu0 %v181
    %v183 = vand.u32 %v18, 4294901760
    %v184 = vsub.f32 %v18, %v183
    %v185 = vand.u32 %v184, 4294901760
    %v186 = vsub.f32 %v184, %v185
    %v187 = vand.u32 %v186, 4294901760
    %188 = vmatpush.msra.mxu0 %v187
    %v189 = vand.u32 %v16, 4294901760
    %190 = vmatmul.f32.gmra.mxu0 %v189
    %v191 = vpop.f32.mrf.mxu0
    %v192 = vadd.f32 %v91, %v191
    %193 = vdwg.mxu0
    %v194 = vand.u32 %v33, 4294901760
    %v195 = vsub.f32 %v33, %v194
    %196 = vmatpush.msra.mxu0 %v195
    %v197 = vand.u32 %v32, 4294901760
    %v198 = vsub.f32 %v32, %v197
    %199 = vmatpush.msra.mxu0 %v198
    %v200 = vand.u32 %v31, 4294901760
    %v201 = vsub.f32 %v31, %v200
    %202 = vmatpush.msra.mxu0 %v201
    %v203 = vand.u32 %v30, 4294901760
    %v204 = vsub.f32 %v30, %v203
    %205 = vmatpush.msra.mxu0 %v204
    %v206 = vand.u32 %v29, 4294901760
    %v207 = vsub.f32 %v29, %v206
    %208 = vmatpush.msra.mxu0 %v207
    %v209 = vand.u32 %v28, 4294901760
    %v210 = vsub.f32 %v28, %v209
    %211 = vmatpush.msra.mxu0 %v210
    %v212 = vand.u32 %v27, 4294901760
    %v213 = vsub.f32 %v27, %v212
    %214 = vmatpush.msra.mxu0 %v213
    %v215 = vand.u32 %v26, 4294901760
    %v216 = vsub.f32 %v26, %v215
    %217 = vmatpush.msra.mxu0 %v216
    %v218 = vand.u32 %v25, 4294901760
    %v219 = vsub.f32 %v25, %v218
    %220 = vmatpush.msra.mxu0 %v219
    %v221 = vand.u32 %v24, 4294901760
    %v222 = vsub.f32 %v24, %v221
    %223 = vmatpush.msra.mxu0 %v222
    %v224 = vand.u32 %v23, 4294901760
    %v225 = vsub.f32 %v23, %v224
    %226 = vmatpush.msra.mxu0 %v225
    %v227 = vand.u32 %v22, 4294901760
    %v228 = vsub.f32 %v22, %v227
    %229 = vmatpush.msra.mxu0 %v228
    %v230 = vand.u32 %v21, 4294901760
    %v231 = vsub.f32 %v21, %v230
    %232 = vmatpush.msra.mxu0 %v231
    %v233 = vand.u32 %v20, 4294901760
    %v234 = vsub.f32 %v20, %v233
    %235 = vmatpush.msra.mxu0 %v234
    %v236 = vand.u32 %v19, 4294901760
    %v237 = vsub.f32 %v19, %v236
    %238 = vmatpush.msra.mxu0 %v237
    %v239 = vand.u32 %v18, 4294901760
    %v240 = vsub.f32 %v18, %v239
    %241 = vmatpush.msra.mxu0 %v240
    %v242 = vand.u32 %v16, 4294901760
    %v243 = vsub.f32 %v16, %v242
    %244 = vmatmul.f32.gmra.mxu0 %v243
    %v245 = vpop.f32.mrf.mxu0
    %v246 = vadd.f32 %v192, %v245
    %247 = vdwg.mxu0
    %v248 = vand.u32 %v33, 4294901760
    %249 = vmatpush.msra.mxu0 %v248
    %v250 = vand.u32 %v32, 4294901760
    %251 = vmatpush.msra.mxu0 %v250
    %v252 = vand.u32 %v31, 4294901760
    %253 = vmatpush.msra.mxu0 %v252
    %v254 = vand.u32 %v30, 4294901760
    %255 = vmatpush.msra.mxu0 %v254
    %v256 = vand.u32 %v29, 4294901760
    %257 = vmatpush.msra.mxu0 %v256
    %v258 = vand.u32 %v28, 4294901760
    %259 = vmatpush.msra.mxu0 %v258
    %v260 = vand.u32 %v27, 4294901760
    %261 = vmatpush.msra.mxu0 %v260
    %v262 = vand.u32 %v26, 4294901760
    %263 = vmatpush.msra.mxu0 %v262
    %v264 = vand.u32 %v25, 4294901760
    %265 = vmatpush.msra.mxu0 %v264
    %v266 = vand.u32 %v24, 4294901760
    %267 = vmatpush.msra.mxu0 %v266
    %v268 = vand.u32 %v23, 4294901760
    %269 = vmatpush.msra.mxu0 %v268
    %v270 = vand.u32 %v22, 4294901760
    %271 = vmatpush.msra.mxu0 %v270
    %v272 = vand.u32 %v21, 4294901760
    %273 = vmatpush.msra.mxu0 %v272
    %v274 = vand.u32 %v20, 4294901760
    %275 = vmatpush.msra.mxu0 %v274
    %v276 = vand.u32 %v19, 4294901760
    %277 = vmatpush.msra.mxu0 %v276
    %v278 = vand.u32 %v18, 4294901760
    %279 = vmatpush.msra.mxu0 %v278
    %v280 = vand.u32 %v16, 4294901760
    %v281 = vsub.f32 %v16, %v280
    %v282 = vand.u32 %v281, 4294901760
    %283 = vmatmul.f32.gmra.mxu0 %v282
    %v284 = vpop.f32.mrf.mxu0
    %v285 = vadd.f32 %v246, %v284
    %286 = vdwg.mxu0
    %v287 = vand.u32 %v33, 4294901760
    %v288 = vsub.f32 %v33, %v287
    %v289 = vand.u32 %v288, 4294901760
    %290 = vmatpush.msra.mxu0 %v289
    %v291 = vand.u32 %v32, 4294901760
    %v292 = vsub.f32 %v32, %v291
    %v293 = vand.u32 %v292, 4294901760
    %294 = vmatpush.msra.mxu0 %v293
    %v295 = vand.u32 %v31, 4294901760
    %v296 = vsub.f32 %v31, %v295
    %v297 = vand.u32 %v296, 4294901760
    %298 = vmatpush.msra.mxu0 %v297
    %v299 = vand.u32 %v30, 4294901760
    %v300 = vsub.f32 %v30, %v299
    %v301 = vand.u32 %v300, 4294901760
    %302 = vmatpush.msra.mxu0 %v301
    %v303 = vand.u32 %v29, 4294901760
    %v304 = vsub.f32 %v29, %v303
    %v305 = vand.u32 %v304, 4294901760
    %306 = vmatpush.msra.mxu0 %v305
    %v307 = vand.u32 %v28, 4294901760
    %v308 = vsub.f32 %v28, %v307
    %v309 = vand.u32 %v308, 4294901760
    %310 = vmatpush.msra.mxu0 %v309
    %v311 = vand.u32 %v27, 4294901760
    %v312 = vsub.f32 %v27, %v311
    %v313 = vand.u32 %v312, 4294901760
    %314 = vmatpush.msra.mxu0 %v313
    %v315 = vand.u32 %v26, 4294901760
    %v316 = vsub.f32 %v26, %v315
    %v317 = vand.u32 %v316, 4294901760
    %318 = vmatpush.msra.mxu0 %v317
    %v319 = vand.u32 %v25, 4294901760
    %v320 = vsub.f32 %v25, %v319
    %v321 = vand.u32 %v320, 4294901760
    %322 = vmatpush.msra.mxu0 %v321
    %v323 = vand.u32 %v24, 4294901760
    %v324 = vsub.f32 %v24, %v323
    %v325 = vand.u32 %v324, 4294901760
    %326 = vmatpush.msra.mxu0 %v325
    %v327 = vand.u32 %v23, 4294901760
    %v328 = vsub.f32 %v23, %v327
    %v329 = vand.u32 %v328, 4294901760
    %330 = vmatpush.msra.mxu0 %v329
    %v331 = vand.u32 %v22, 4294901760
    %v332 = vsub.f32 %v22, %v331
    %v333 = vand.u32 %v332, 4294901760
    %334 = vmatpush.msra.mxu0 %v333
    %v335 = vand.u32 %v21, 4294901760
    %v336 = vsub.f32 %v21, %v335
    %v337 = vand.u32 %v336, 4294901760
    %338 = vmatpush.msra.mxu0 %v337
    %v339 = vand.u32 %v20, 4294901760
    %v340 = vsub.f32 %v20, %v339
    %v341 = vand.u32 %v340, 4294901760
    %342 = vmatpush.msra.mxu0 %v341
    %v343 = vand.u32 %v19, 4294901760
    %v344 = vsub.f32 %v19, %v343
    %v345 = vand.u32 %v344, 4294901760
    %346 = vmatpush.msra.mxu0 %v345
    %v347 = vand.u32 %v18, 4294901760
    %v348 = vsub.f32 %v18, %v347
    %v349 = vand.u32 %v348, 4294901760
    %350 = vmatpush.msra.mxu0 %v349
    %v351 = vand.u32 %v16, 4294901760
    %352 = vmatmul.f32.gmra.mxu0 %v351
    %v353 = vpop.f32.mrf.mxu0
    %v354 = vadd.f32 %v285, %v353
    %355 = vdwg.mxu0
    %v356 = vand.u32 %v33, 4294901760
    %357 = vmatpush.msra.mxu0 %v356
    %v358 = vand.u32 %v32, 4294901760
    %359 = vmatpush.msra.mxu0 %v358
    %v360 = vand.u32 %v31, 4294901760
    %361 = vmatpush.msra.mxu0 %v360
    %v362 = vand.u32 %v30, 4294901760
    %363 = vmatpush.msra.mxu0 %v362
    %v364 = vand.u32 %v29, 4294901760
    %365 = vmatpush.msra.mxu0 %v364
    %v366 = vand.u32 %v28, 4294901760
    %367 = vmatpush.msra.mxu0 %v366
    %v368 = vand.u32 %v27, 4294901760
    %369 = vmatpush.msra.mxu0 %v368
    %v370 = vand.u32 %v26, 4294901760
    %371 = vmatpush.msra.mxu0 %v370
    %v372 = vand.u32 %v25, 4294901760
    %373 = vmatpush.msra.mxu0 %v372
    %v374 = vand.u32 %v24, 4294901760
    %375 = vmatpush.msra.mxu0 %v374
    %v376 = vand.u32 %v23, 4294901760
    %377 = vmatpush.msra.mxu0 %v376
    %v378 = vand.u32 %v22, 4294901760
    %379 = vmatpush.msra.mxu0 %v378
    %v380 = vand.u32 %v21, 4294901760
    %381 = vmatpush.msra.mxu0 %v380
    %v382 = vand.u32 %v20, 4294901760
    %383 = vmatpush.msra.mxu0 %v382
    %v384 = vand.u32 %v19, 4294901760
    %385 = vmatpush.msra.mxu0 %v384
    %v386 = vand.u32 %v18, 4294901760
    %387 = vmatpush.msra.mxu0 %v386
    %v388 = vand.u32 %v16, 4294901760
    %389 = vmatmul.f32.gmra.mxu0 %v388
    %v390 = vpop.f32.mrf.mxu0
    %v391 = vadd.f32 %v354, %v390
    %392 = vdwg.mxu0
    %v393 = vand.u32 %v49, 4294901760
    %394 = vmatpush.msra.mxu0 %v393
    %v395 = vand.u32 %v48, 4294901760
    %396 = vmatpush.msra.mxu0 %v395
    %v397 = vand.u32 %v47, 4294901760
    %398 = vmatpush.msra.mxu0 %v397
    %v399 = vand.u32 %v46, 4294901760
    %400 = vmatpush.msra.mxu0 %v399
    %v401 = vand.u32 %v45, 4294901760
    %402 = vmatpush.msra.mxu0 %v401
    %v403 = vand.u32 %v44, 4294901760
    %404 = vmatpush.msra.mxu0 %v403
    %v405 = vand.u32 %v43, 4294901760
    %406 = vmatpush.msra.mxu0 %v405
    %v407 = vand.u32 %v42, 4294901760
    %408 = vmatpush.msra.mxu0 %v407
    %v409 = vand.u32 %v41, 4294901760
    %410 = vmatpush.msra.mxu0 %v409
    %v411 = vand.u32 %v40, 4294901760
    %412 = vmatpush.msra.mxu0 %v411
    %v413 = vand.u32 %v39, 4294901760
    %414 = vmatpush.msra.mxu0 %v413
    %v415 = vand.u32 %v38, 4294901760
    %416 = vmatpush.msra.mxu0 %v415
    %v417 = vand.u32 %v37, 4294901760
    %418 = vmatpush.msra.mxu0 %v417
    %v419 = vand.u32 %v36, 4294901760
    %420 = vmatpush.msra.mxu0 %v419
    %v421 = vand.u32 %v35, 4294901760
    %422 = vmatpush.msra.mxu0 %v421
    %v423 = vand.u32 %v34, 4294901760
    %424 = vmatpush.msra.mxu0 %v423
    %v425 = vand.u32 %v17, 4294901760
    %v426 = vsub.f32 %v17, %v425
    %v427 = vand.u32 %v426, 4294901760
    %v428 = vsub.f32 %v426, %v427
    %v429 = vand.u32 %v428, 4294901760
    %430 = vmatmul.f32.gmra.mxu0 %v429
    %v431 = vpop.f32.mrf.mxu0
    %v432 = vadd.f32 %v391, %v431
    %433 = vdwg.mxu0
    %v434 = vand.u32 %v49, 4294901760
    %v435 = vsub.f32 %v49, %v434
    %v436 = vand.u32 %v435, 4294901760
    %v437 = vsub.f32 %v435, %v436
    %v438 = vand.u32 %v437, 4294901760
    %439 = vmatpush.msra.mxu0 %v438
    %v440 = vand.u32 %v48, 4294901760
    %v441 = vsub.f32 %v48, %v440
    %v442 = vand.u32 %v441, 4294901760
    %v443 = vsub.f32 %v441, %v442
    %v444 = vand.u32 %v443, 4294901760
    %445 = vmatpush.msra.mxu0 %v444
    %v446 = vand.u32 %v47, 4294901760
    %v447 = vsub.f32 %v47, %v446
    %v448 = vand.u32 %v447, 4294901760
    %v449 = vsub.f32 %v447, %v448
    %v450 = vand.u32 %v449, 4294901760
    %451 = vmatpush.msra.mxu0 %v450
    %v452 = vand.u32 %v46, 4294901760
    %v453 = vsub.f32 %v46, %v452
    %v454 = vand.u32 %v453, 4294901760
    %v455 = vsub.f32 %v453, %v454
    %v456 = vand.u32 %v455, 4294901760
    %457 = vmatpush.msra.mxu0 %v456
    %v458 = vand.u32 %v45, 4294901760
    %v459 = vsub.f32 %v45, %v458
    %v460 = vand.u32 %v459, 4294901760
    %v461 = vsub.f32 %v459, %v460
    %v462 = vand.u32 %v461, 4294901760
    %463 = vmatpush.msra.mxu0 %v462
    %v464 = vand.u32 %v44, 4294901760
    %v465 = vsub.f32 %v44, %v464
    %v466 = vand.u32 %v465, 4294901760
    %v467 = vsub.f32 %v465, %v466
    %v468 = vand.u32 %v467, 4294901760
    %469 = vmatpush.msra.mxu0 %v468
    %v470 = vand.u32 %v43, 4294901760
    %v471 = vsub.f32 %v43, %v470
    %v472 = vand.u32 %v471, 4294901760
    %v473 = vsub.f32 %v471, %v472
    %v474 = vand.u32 %v473, 4294901760
    %475 = vmatpush.msra.mxu0 %v474
    %v476 = vand.u32 %v42, 4294901760
    %v477 = vsub.f32 %v42, %v476
    %v478 = vand.u32 %v477, 4294901760
    %v479 = vsub.f32 %v477, %v478
    %v480 = vand.u32 %v479, 4294901760
    %481 = vmatpush.msra.mxu0 %v480
    %v482 = vand.u32 %v41, 4294901760
    %v483 = vsub.f32 %v41, %v482
    %v484 = vand.u32 %v483, 4294901760
    %v485 = vsub.f32 %v483, %v484
    %v486 = vand.u32 %v485, 4294901760
    %487 = vmatpush.msra.mxu0 %v486
    %v488 = vand.u32 %v40, 4294901760
    %v489 = vsub.f32 %v40, %v488
    %v490 = vand.u32 %v489, 4294901760
    %v491 = vsub.f32 %v489, %v490
    %v492 = vand.u32 %v491, 4294901760
    %493 = vmatpush.msra.mxu0 %v492
    %v494 = vand.u32 %v39, 4294901760
    %v495 = vsub.f32 %v39, %v494
    %v496 = vand.u32 %v495, 4294901760
    %v497 = vsub.f32 %v495, %v496
    %v498 = vand.u32 %v497, 4294901760
    %499 = vmatpush.msra.mxu0 %v498
    %v500 = vand.u32 %v38, 4294901760
    %v501 = vsub.f32 %v38, %v500
    %v502 = vand.u32 %v501, 4294901760
    %v503 = vsub.f32 %v501, %v502
    %v504 = vand.u32 %v503, 4294901760
    %505 = vmatpush.msra.mxu0 %v504
    %v506 = vand.u32 %v37, 4294901760
    %v507 = vsub.f32 %v37, %v506
    %v508 = vand.u32 %v507, 4294901760
    %v509 = vsub.f32 %v507, %v508
    %v510 = vand.u32 %v509, 4294901760
    %511 = vmatpush.msra.mxu0 %v510
    %v512 = vand.u32 %v36, 4294901760
    %v513 = vsub.f32 %v36, %v512
    %v514 = vand.u32 %v513, 4294901760
    %v515 = vsub.f32 %v513, %v514
    %v516 = vand.u32 %v515, 4294901760
    %517 = vmatpush.msra.mxu0 %v516
    %v518 = vand.u32 %v35, 4294901760
    %v519 = vsub.f32 %v35, %v518
    %v520 = vand.u32 %v519, 4294901760
    %v521 = vsub.f32 %v519, %v520
    %v522 = vand.u32 %v521, 4294901760
    %523 = vmatpush.msra.mxu0 %v522
    %v524 = vand.u32 %v34, 4294901760
    %v525 = vsub.f32 %v34, %v524
    %v526 = vand.u32 %v525, 4294901760
    %v527 = vsub.f32 %v525, %v526
    %v528 = vand.u32 %v527, 4294901760
    %529 = vmatpush.msra.mxu0 %v528
    %v530 = vand.u32 %v17, 4294901760
    %531 = vmatmul.f32.gmra.mxu0 %v530
    %v532 = vpop.f32.mrf.mxu0
    %v533 = vadd.f32 %v432, %v532
    %534 = vdwg.mxu0
    %v535 = vand.u32 %v49, 4294901760
    %v536 = vsub.f32 %v49, %v535
    %537 = vmatpush.msra.mxu0 %v536
    %v538 = vand.u32 %v48, 4294901760
    %v539 = vsub.f32 %v48, %v538
    %540 = vmatpush.msra.mxu0 %v539
    %v541 = vand.u32 %v47, 4294901760
    %v542 = vsub.f32 %v47, %v541
    %543 = vmatpush.msra.mxu0 %v542
    %v544 = vand.u32 %v46, 4294901760
    %v545 = vsub.f32 %v46, %v544
    %546 = vmatpush.msra.mxu0 %v545
    %v547 = vand.u32 %v45, 4294901760
    %v548 = vsub.f32 %v45, %v547
    %549 = vmatpush.msra.mxu0 %v548
    %v550 = vand.u32 %v44, 4294901760
    %v551 = vsub.f32 %v44, %v550
    %552 = vmatpush.msra.mxu0 %v551
    %v553 = vand.u32 %v43, 4294901760
    %v554 = vsub.f32 %v43, %v553
    %555 = vmatpush.msra.mxu0 %v554
    %v556 = vand.u32 %v42, 4294901760
    %v557 = vsub.f32 %v42, %v556
    %558 = vmatpush.msra.mxu0 %v557
    %v559 = vand.u32 %v41, 4294901760
    %v560 = vsub.f32 %v41, %v559
    %561 = vmatpush.msra.mxu0 %v560
    %v562 = vand.u32 %v40, 4294901760
    %v563 = vsub.f32 %v40, %v562
    %564 = vmatpush.msra.mxu0 %v563
    %v565 = vand.u32 %v39, 4294901760
    %v566 = vsub.f32 %v39, %v565
    %567 = vmatpush.msra.mxu0 %v566
    %v568 = vand.u32 %v38, 4294901760
    %v569 = vsub.f32 %v38, %v568
    %570 = vmatpush.msra.mxu0 %v569
    %v571 = vand.u32 %v37, 4294901760
    %v572 = vsub.f32 %v37, %v571
    %573 = vmatpush.msra.mxu0 %v572
    %v574 = vand.u32 %v36, 4294901760
    %v575 = vsub.f32 %v36, %v574
    %576 = vmatpush.msra.mxu0 %v575
    %v577 = vand.u32 %v35, 4294901760
    %v578 = vsub.f32 %v35, %v577
    %579 = vmatpush.msra.mxu0 %v578
    %v580 = vand.u32 %v34, 4294901760
    %v581 = vsub.f32 %v34, %v580
    %582 = vmatpush.msra.mxu0 %v581
    %v583 = vand.u32 %v17, 4294901760
    %v584 = vsub.f32 %v17, %v583
    %585 = vmatmul.f32.gmra.mxu0 %v584
    %v586 = vpop.f32.mrf.mxu0
    %v587 = vadd.f32 %v533, %v586
    %588 = vdwg.mxu0
    %v589 = vand.u32 %v49, 4294901760
    %590 = vmatpush.msra.mxu0 %v589
    %v591 = vand.u32 %v48, 4294901760
    %592 = vmatpush.msra.mxu0 %v591
    %v593 = vand.u32 %v47, 4294901760
    %594 = vmatpush.msra.mxu0 %v593
    %v595 = vand.u32 %v46, 4294901760
    %596 = vmatpush.msra.mxu0 %v595
    %v597 = vand.u32 %v45, 4294901760
    %598 = vmatpush.msra.mxu0 %v597
    %v599 = vand.u32 %v44, 4294901760
    %600 = vmatpush.msra.mxu0 %v599
    %v601 = vand.u32 %v43, 4294901760
    %602 = vmatpush.msra.mxu0 %v601
    %v603 = vand.u32 %v42, 4294901760
    %604 = vmatpush.msra.mxu0 %v603
    %v605 = vand.u32 %v41, 4294901760
    %606 = vmatpush.msra.mxu0 %v605
    %v607 = vand.u32 %v40, 4294901760
    %608 = vmatpush.msra.mxu0 %v607
    %v609 = vand.u32 %v39, 4294901760
    %610 = vmatpush.msra.mxu0 %v609
    %v611 = vand.u32 %v38, 4294901760
    %612 = vmatpush.msra.mxu0 %v611
    %v613 = vand.u32 %v37, 4294901760
    %614 = vmatpush.msra.mxu0 %v613
    %v615 = vand.u32 %v36, 4294901760
    %616 = vmatpush.msra.mxu0 %v615
    %v617 = vand.u32 %v35, 4294901760
    %618 = vmatpush.msra.mxu0 %v617
    %v619 = vand.u32 %v34, 4294901760
    %620 = vmatpush.msra.mxu0 %v619
    %v621 = vand.u32 %v17, 4294901760
    %v622 = vsub.f32 %v17, %v621
    %v623 = vand.u32 %v622, 4294901760
    %624 = vmatmul.f32.gmra.mxu0 %v623
    %v625 = vpop.f32.mrf.mxu0
    %v626 = vadd.f32 %v587, %v625
    %627 = vdwg.mxu0
    %v628 = vand.u32 %v49, 4294901760
    %v629 = vsub.f32 %v49, %v628
    %v630 = vand.u32 %v629, 4294901760
    %631 = vmatpush.msra.mxu0 %v630
    %v632 = vand.u32 %v48, 4294901760
    %v633 = vsub.f32 %v48, %v632
    %v634 = vand.u32 %v633, 4294901760
    %635 = vmatpush.msra.mxu0 %v634
    %v636 = vand.u32 %v47, 4294901760
    %v637 = vsub.f32 %v47, %v636
    %v638 = vand.u32 %v637, 4294901760
    %639 = vmatpush.msra.mxu0 %v638
    %v640 = vand.u32 %v46, 4294901760
    %v641 = vsub.f32 %v46, %v640
    %v642 = vand.u32 %v641, 4294901760
    %643 = vmatpush.msra.mxu0 %v642
    %v644 = vand.u32 %v45, 4294901760
    %v645 = vsub.f32 %v45, %v644
    %v646 = vand.u32 %v645, 4294901760
    %647 = vmatpush.msra.mxu0 %v646
    %v648 = vand.u32 %v44, 4294901760
    %v649 = vsub.f32 %v44, %v648
    %v650 = vand.u32 %v649, 4294901760
    %651 = vmatpush.msra.mxu0 %v650
    %v652 = vand.u32 %v43, 4294901760
    %v653 = vsub.f32 %v43, %v652
    %v654 = vand.u32 %v653, 4294901760
    %655 = vmatpush.msra.mxu0 %v654
    %v656 = vand.u32 %v42, 4294901760
    %v657 = vsub.f32 %v42, %v656
    %v658 = vand.u32 %v657, 4294901760
    %659 = vmatpush.msra.mxu0 %v658
    %v660 = vand.u32 %v41, 4294901760
    %v661 = vsub.f32 %v41, %v660
    %v662 = vand.u32 %v661, 4294901760
    %663 = vmatpush.msra.mxu0 %v662
    %v664 = vand.u32 %v40, 4294901760
    %v665 = vsub.f32 %v40, %v664
    %v666 = vand.u32 %v665, 4294901760
    %667 = vmatpush.msra.mxu0 %v666
    %v668 = vand.u32 %v39, 4294901760
    %v669 = vsub.f32 %v39, %v668
    %v670 = vand.u32 %v669, 4294901760
    %671 = vmatpush.msra.mxu0 %v670
    %v672 = vand.u32 %v38, 4294901760
    %v673 = vsub.f32 %v38, %v672
    %v674 = vand.u32 %v673, 4294901760
    %675 = vmatpush.msra.mxu0 %v674
    %v676 = vand.u32 %v37, 4294901760
    %v677 = vsub.f32 %v37, %v676
    %v678 = vand.u32 %v677, 4294901760
    %679 = vmatpush.msra.mxu0 %v678
    %v680 = vand.u32 %v36, 4294901760
    %v681 = vsub.f32 %v36, %v680
    %v682 = vand.u32 %v681, 4294901760
    %683 = vmatpush.msra.mxu0 %v682
    %v684 = vand.u32 %v35, 4294901760
    %v685 = vsub.f32 %v35, %v684
    %v686 = vand.u32 %v685, 4294901760
    %687 = vmatpush.msra.mxu0 %v686
    %v688 = vand.u32 %v34, 4294901760
    %v689 = vsub.f32 %v34, %v688
    %v690 = vand.u32 %v689, 4294901760
    %691 = vmatpush.msra.mxu0 %v690
    %v692 = vand.u32 %v17, 4294901760
    %693 = vmatmul.f32.gmra.mxu0 %v692
    %v694 = vpop.f32.mrf.mxu0
    %v695 = vadd.f32 %v626, %v694
    %696 = vdwg.mxu0
    %v697 = vand.u32 %v49, 4294901760
    %698 = vmatpush.msra.mxu0 %v697
    %v699 = vand.u32 %v48, 4294901760
    %700 = vmatpush.msra.mxu0 %v699
    %v701 = vand.u32 %v47, 4294901760
    %702 = vmatpush.msra.mxu0 %v701
    %v703 = vand.u32 %v46, 4294901760
    %704 = vmatpush.msra.mxu0 %v703
    %v705 = vand.u32 %v45, 4294901760
    %706 = vmatpush.msra.mxu0 %v705
    %v707 = vand.u32 %v44, 4294901760
    %708 = vmatpush.msra.mxu0 %v707
    %v709 = vand.u32 %v43, 4294901760
    %710 = vmatpush.msra.mxu0 %v709
    %v711 = vand.u32 %v42, 4294901760
    %712 = vmatpush.msra.mxu0 %v711
    %v713 = vand.u32 %v41, 4294901760
    %714 = vmatpush.msra.mxu0 %v713
    %v715 = vand.u32 %v40, 4294901760
    %716 = vmatpush.msra.mxu0 %v715
    %v717 = vand.u32 %v39, 4294901760
    %718 = vmatpush.msra.mxu0 %v717
    %v719 = vand.u32 %v38, 4294901760
    %720 = vmatpush.msra.mxu0 %v719
    %v721 = vand.u32 %v37, 4294901760
    %722 = vmatpush.msra.mxu0 %v721
    %v723 = vand.u32 %v36, 4294901760
    %724 = vmatpush.msra.mxu0 %v723
    %v725 = vand.u32 %v35, 4294901760
    %726 = vmatpush.msra.mxu0 %v725
    %v727 = vand.u32 %v34, 4294901760
    %728 = vmatpush.msra.mxu0 %v727
    %v729 = vand.u32 %v17, 4294901760
    %730 = vmatmul.f32.gmra.mxu0 %v729
    %v731 = vpop.f32.mrf.mxu0
    %v732 = vadd.f32 %v695, %v731
    %733 = vdwg.mxu0
    %734 = vst [vmem:[#allocation3] sm:$0xff] %v732
    // Predicated region
    $region14: #{simple_stock_model.1} parent=1 // pred_check
      _
    $region15: #{simple_stock_model.1} parent=1 // pred_check_branch
      %736 = sbr.rel (0) target = $region17
    $region16: #{simple_stock_model.1} parent=1 // pred_region
      %738 = vsyncadd [#allocation4], 0
      %s740 = sshll.u32 [#allocation3], 4
      %s741 = int_to_ptr.vmem [resolvable:$true] %s740
      %s742 = sshll.u32 %s3, 4
      %s743 = int_to_ptr.hbm [resolvable:$true] %s742
      %745 = dma.vmem_to_hbm [thread:$0]  %s741, 128, %s743, [#allocation4]
    $region17: #{simple_stock_model.1} parent=1 // pred_fallthru
      _
    // Predicated region
    $region18: #{simple_stock_model.1} parent=1 // pred_check
      _
    $region19: #{simple_stock_model.1} parent=1 // pred_check_branch
      %747 = sbr.rel (0) target = $region21
    $region20: #{simple_stock_model.1} parent=1 // pred_region
      %749 = dma.done [#allocation4], 128
    $region21: #{simple_stock_model.1} parent=1 // pred_fallthru
      _
    %750 = vsyncpa [#allocation4], 1

</llo_original>
